<compile_context>
chip_gen: v7x
topology: tpu7x:2x2x1
jax: 0.10.0
libtpu: 0.0.40
codegen_flags: <defaults>
</compile_context>

<pallas_src>
import functools

import numpy as np
import jax
import jax.numpy as jnp
from jax import lax
from jax.experimental import pallas as pl
from jax.experimental.pallas import tpu as pltpu


def basic_block_kernel(x_ref, w1_ref, b1_ref, w2_ref, b2_ref, o_ref):
    """One batch block per grid step, processed as a single (B*H, W*C) slab.

    x_ref : (B, H, W*C)    input block (NHWC with W,C folded), also the identity
    w1_ref: (3, W*C, W*C)  conv1 block-tridiag weights with BN1 scale folded in
    b1_ref: (1, W*C)       folded BN1 bias (tiled over W)
    w2_ref: (3, W*C, W*C)  conv2 block-tridiag weights with BN2 scale folded in
    b2_ref: (1, W*C)       folded BN2 bias
    o_ref : (B, H, W*C)    float32 output block
    """
    B, H, WC = x_ref.shape
    BH = B * H

    x = x_ref[...].reshape(BH, WC)          # lane-dense slab, matmul M = B*H
    x32 = x.astype(jnp.float32)

    # Per-row image-boundary masks (computed once, reused by both convs).
    row = lax.broadcasted_iota(jnp.int32, (BH, 1), 0)
    top = (row % H) == 0                    # no row above inside this image
    bot = (row % H) == (H - 1)              # no row below inside this image

    b1 = b1_ref[...]                        # (1, WC) f32
    b2 = b2_ref[...]

    def shifted(v32, dtype):
        # XLU sublane rotations over the whole slab; the wrap-around rows
        # (image boundaries) are zeroed by the mask, reproducing the conv's
        # H-direction zero padding.  Cast and roll commute, so casting the
        # rolled f32 slab to `dtype` equals rolling the `dtype` tensor.
        v_up = jnp.where(top, 0.0, pltpu.roll(v32, shift=1, axis=0))
        v_dn = jnp.where(bot, 0.0, pltpu.roll(v32, shift=BH - 1, axis=0))
        return v_up.astype(dtype), v_dn.astype(dtype)

    def conv_bn(v, v32, w_ref, bias):
        v_up, v_dn = shifted(v32, v.dtype)
        # 3 large MXU matmuls; W taps / W padding / BN scale live in w_ref.
        acc = jnp.dot(v_up, w_ref[0], preferred_element_type=jnp.float32)
        acc += jnp.dot(v, w_ref[1], preferred_element_type=jnp.float32)
        acc += jnp.dot(v_dn, w_ref[2], preferred_element_type=jnp.float32)
        return acc + bias                   # f32

    # conv1 -> BN1 -> ReLU
    y1_32 = jnp.maximum(conv_bn(x, x32, w1_ref, b1), 0.0)
    y1 = y1_32.astype(x.dtype)
    # conv2 -> BN2 -> +identity -> ReLU   (identity read from the same block)
    out = jnp.maximum(conv_bn(y1, y1_32, w2_ref, b2) + x32, 0.0)
    o_ref[...] = out.reshape(B, H, WC).astype(o_ref.dtype)


def _block_tridiag_weights(w_hwio, w_spatial, scale, dtype):
    """(3,3,Ci,Co) HWIO conv weights -> (3, W*Ci, W*Co) block-tridiag matrices
    with the folded-BN per-output-channel `scale` baked into the columns.

    M_kh[a*Ci+ci, j*Co+co] = w[kh, a-j+1, ci, co] * scale[co] for a-j in
    {-1,0,1} (else 0), so out_row[i] = sum_kh x_row[i+kh-1] @ M_kh reproduces
    the 3x3 conv with padding=1 along W followed by the BN scale.
    """
    kh_mats = []
    for kh in range(3):
        m = None
        for kw in range(3):
            sel = jnp.eye(w_spatial, k=1 - kw, dtype=jnp.float32)
            blk = jnp.kron(sel, w_hwio[kh, kw].astype(jnp.float32))
            m = blk if m is None else m + blk
        kh_mats.append(m)
    mats = jnp.stack(kh_mats, axis=0)                          # (3, W*Ci, W*Co)
    mats = mats * jnp.tile(scale, w_spatial)[None, None, :]    # fold BN scale
    return mats.astype(dtype)


def _pick_batch_block(n, h, wc, x_bytes, out_bytes):
    """Images per grid step: sized from the VMEM budget and a target matmul-M,
    not from 'grid >= 2'.  N not divisible by the block is handled by padding
    the batch in the wrapper (no silent fallback to b_blk=1)."""
    # Per-image VMEM: double-buffered input + output blocks, plus ~10 f32-sized
    # intermediate slabs the compiler keeps live inside the body.
    per_image = h * wc * (2 * x_bytes + 2 * out_bytes + 10 * 4)
    budget = 12 * 1024 * 1024      # fits v5e's 16 MiB and v7x's 32 MiB scoped defaults
    cap = max(1, budget // per_image)
    target = max(1, -(-1024 // h))         # aim for >= ~1024 rows in the M dim
    b = max(1, min(cap, target, n))
    steps = -(-n // b)
    # Prefer an even number of grid steps (both v7x TensorCores busy) as long
    # as each step keeps a reasonably large M (>= 128 rows).
    if steps == 1 and n >= 2 and (-(-n // 2)) * h >= 128:
        b = -(-n // 2)
    elif steps > 1 and steps % 2 == 1:
        b_even = -(-n // (steps + 1))
        if b_even * h >= 128:
            b = b_even
    return b


@functools.partial(jax.jit, static_argnames=("eps", "compute_dtype"))
def basic_block_forward(x_nchw, params, eps=1e-5, compute_dtype=jnp.bfloat16):
    """x_nchw: (N, C, H, W) float32 -> (N, C, H, W) float32.

    compute_dtype=bf16 (default) halves HBM<->VMEM bytes and uses the MXU at
    native bf16 rate; accumulation and all BN/ReLU/residual math stay f32.
    Pass jnp.float32 for bit-tight numerics (on bf16 the identity and the
    inter-conv activation are bf16-rounded, expect ~1e-2-level drift).
    """
    (w1, g1, be1, m1, v1, w2, g2, be2, m2, v2) = params
    N, C, H, W = x_nchw.shape
    assert w1.shape[-1] == C, "downsample=None requires in_channel == out_channel"
    WC = W * C
    # Scalability guard: weight VMEM grows as 3*(W*C)^2 per conv and FLOPs
    # inflate ~W/3x vs. the true conv.  Beyond WC ~ 512 switch to a
    # channels-on-lanes (N,H,W,C) layout with K=C accumulating dots.
    assert WC <= 512, "block-tridiagonal formulation only intended for W*C <= 512"

    # NCHW -> (N, H, W*C): channels folded into the lane axis.  No spatial pad
    # (H boundary handled in-kernel, W boundary baked into the weights).
    x_f = jnp.transpose(x_nchw, (0, 2, 3, 1)).reshape(N, H, WC).astype(compute_dtype)

    # Fold inference-mode BatchNorm into per-channel scale/bias; the scale is
    # baked into the conv weight columns, only the bias reaches the kernel.
    s1 = g1 / jnp.sqrt(v1 + eps)
    b1 = be1 - m1 * s1
    s2 = g2 / jnp.sqrt(v2 + eps)
    b2 = be2 - m2 * s2
    wt1 = _block_tridiag_weights(w1, W, s1, compute_dtype)
    wt2 = _block_tridiag_weights(w2, W, s2, compute_dtype)
    b1_t = jnp.tile(b1, W).reshape(1, WC).astype(jnp.float32)
    b2_t = jnp.tile(b2, W).reshape(1, WC).astype(jnp.float32)

    x_bytes = np.dtype(compute_dtype).itemsize
    b_blk = _pick_batch_block(N, H, WC, x_bytes, 4)
    n_pad = -(-N // b_blk) * b_blk
    if n_pad != N:
        x_f = jnp.pad(x_f, ((0, n_pad - N), (0, 0), (0, 0)))

    out_f = pl.pallas_call(
        basic_block_kernel,
        out_shape=jax.ShapeDtypeStruct((n_pad, H, WC), jnp.float32),
        grid_spec=pltpu.PrefetchScalarGridSpec(
            num_scalar_prefetch=0,
            grid=(n_pad // b_blk,),
            in_specs=[
                pl.BlockSpec((b_blk, H, WC), lambda n: (n, 0, 0)),
                # Grid-invariant weights / biases.  (pl.Buffered(1) would halve
                # their double-buffered VMEM, negligible at WC=128.)
                pl.BlockSpec((3, WC, WC), lambda n: (0, 0, 0)),
                pl.BlockSpec((1, WC), lambda n: (0, 0)),
                pl.BlockSpec((3, WC, WC), lambda n: (0, 0, 0)),
                pl.BlockSpec((1, WC), lambda n: (0, 0)),
            ],
            out_specs=pl.BlockSpec((b_blk, H, WC), lambda n: (n, 0, 0)),
        ),
        # Footprint at the chosen b_blk is a few MiB, well under the scoped
        # VMEM default on v5e/v6e/v7x, so vmem_limit_bytes is left alone.
        compiler_params=pltpu.CompilerParams(
            dimension_semantics=("parallel",)),
    )(x_f, wt1, b1_t, wt2, b2_t)

    out_f = out_f[:N]
    return jnp.transpose(out_f.reshape(N, H, W, C), (0, 3, 1, 2))


def reference_forward(x_nchw, params, eps=1e-5):
    """Pure-JAX (lax.conv) reference of the PyTorch forward, inference-mode BN."""
    (w1, g1, be1, m1, v1, w2, g2, be2, m2, v2) = params
    dn = ('NCHW', 'OIHW', 'NCHW')
    w1_oihw = jnp.transpose(w1, (3, 2, 0, 1))
    w2_oihw = jnp.transpose(w2, (3, 2, 0, 1))

    def bn(y, g, b, m, v):
        return (y - m[None, :, None, None]) / jnp.sqrt(v + eps)[None, :, None, None] \
               * g[None, :, None, None] + b[None, :, None, None]

    out = lax.conv_general_dilated(x_nchw, w1_oihw, (1, 1), ((1, 1), (1, 1)),
                                   dimension_numbers=dn)
    out = jnp.maximum(bn(out, g1, be1, m1, v1), 0.0)
    out = lax.conv_general_dilated(out, w2_oihw, (1, 1), ((1, 1), (1, 1)),
                                   dimension_numbers=dn)
    out = bn(out, g2, be2, m2, v2) + x_nchw
    return jnp.maximum(out, 0.0)


if __name__ == "__main__":
    key = jax.random.PRNGKey(0)
    N, C, H, W = 2, 8, 16, 16   # in_channel == out_channel == 8, stride=1, W*C=128
    ks = jax.random.split(key, 11)

    x = jax.random.normal(ks[0], (N, C, H, W), jnp.float32)

    # Deterministic parameter init (shapes follow BasicBlock.__init__), HWIO conv weights
    w1 = jax.random.normal(ks[1], (3, 3, C, C), jnp.float32) * 0.1
    w2 = jax.random.normal(ks[2], (3, 3, C, C), jnp.float32) * 0.1
    g1 = jax.random.uniform(ks[3], (C,), jnp.float32, 0.5, 1.5)
    be1 = jax.random.normal(ks[4], (C,), jnp.float32) * 0.1
    m1 = jax.random.normal(ks[5], (C,), jnp.float32) * 0.1
    v1 = jax.random.uniform(ks[6], (C,), jnp.float32, 0.5, 1.5)
    g2 = jax.random.uniform(ks[7], (C,), jnp.float32, 0.5, 1.5)
    be2 = jax.random.normal(ks[8], (C,), jnp.float32) * 0.1
    m2 = jax.random.normal(ks[9], (C,), jnp.float32) * 0.1
    v2 = jax.random.uniform(ks[10], (C,), jnp.float32, 0.5, 1.5)

    params = (w1, g1, be1, m1, v1, w2, g2, be2, m2, v2)

    ref = reference_forward(x, params)

    # f32 compute path: bit-tight check against the lax.conv reference.
    out = jax.block_until_ready(basic_block_forward(x, params, compute_dtype=jnp.float32))
    assert out.shape == (N, C, H, W)
    assert jnp.allclose(out, ref, atol=1e-4, rtol=1e-4), \
        f"f32 max diff {jnp.max(jnp.abs(out - ref))}"

    # Default bf16 compute path: half the DMA bytes; looser tolerance because
    # the identity and the inter-conv activation are bf16-rounded.
    out_bf16 = jax.block_until_ready(basic_block_forward(x, params))
    assert jnp.allclose(out_bf16, ref, atol=1e-1, rtol=1e-1), \
        f"bf16 max diff {jnp.max(jnp.abs(out_bf16 - ref))}"

    print("KERNEL_OK")
</pallas_src>

<mosaic_0001>
module attributes {stable_mosaic.version = 11 : i64} {
  func.func @basic_block_kernel(%arg0: i32, %arg1: memref<2x16x128xf32, #tpu.memory_space<vmem>>, %arg2: memref<3x128x128xf32, #tpu.memory_space<vmem>>, %arg3: memref<1x128xf32, #tpu.memory_space<vmem>>, %arg4: memref<3x128x128xf32, #tpu.memory_space<vmem>>, %arg5: memref<1x128xf32, #tpu.memory_space<vmem>>, %arg6: memref<2x16x128xf32, #tpu.memory_space<vmem>>) attributes {dimension_semantics = [#tpu.dimension_semantics<parallel>], iteration_bounds = array<i64: 1>, scalar_prefetch = 0 : i64, scratch_operands = 0 : i64, tpu.core_type = #tpu.core_type<tc>, window_params = [{transform_indices = @transform_0, window_bounds = array<i64: 2, 16, 128>}, {pipeline_mode = #tpu.pipeline_mode<synchronous>, transform_indices = @transform_1, window_bounds = array<i64: 3, 128, 128>}, {pipeline_mode = #tpu.pipeline_mode<synchronous>, transform_indices = @transform_2, window_bounds = array<i64: 1, 128>}, {pipeline_mode = #tpu.pipeline_mode<synchronous>, transform_indices = @transform_3, window_bounds = array<i64: 3, 128, 128>}, {pipeline_mode = #tpu.pipeline_mode<synchronous>, transform_indices = @transform_4, window_bounds = array<i64: 1, 128>}, {transform_indices = @transform_5, window_bounds = array<i64: 2, 16, 128>}]} {
    %c0 = arith.constant 0 : index
    %c0_0 = arith.constant 0 : index
    %c0_1 = arith.constant 0 : index
    %0 = vector.load %arg1[%c0, %c0_0, %c0_1] : memref<2x16x128xf32, #tpu.memory_space<vmem>>, vector<2x16x128xf32>
    %1 = vector.shape_cast %0 : vector<2x16x128xf32> to vector<32x128xf32>
    %2 = tpu.iota {dimensions = array<i32: 0>} : vector<32x1xi32>
    %c16_i32 = arith.constant 16 : i32
    %c0_i32 = arith.constant 0 : i32
    %3 = arith.cmpi eq, %c16_i32, %c0_i32 : i32
    %c1_i32 = arith.constant 1 : i32
    %4 = arith.select %3, %c1_i32, %c16_i32 : i32
    %5 = vector.broadcast %4 : i32 to vector<32x1xi32>
    %6 = arith.remsi %2, %5 : vector<32x1xi32>
    %c0_i32_2 = arith.constant 0 : i32
    %7 = vector.broadcast %c0_i32_2 : i32 to vector<32x1xi32>
    %8 = arith.cmpi ne, %6, %7 : vector<32x1xi32>
    %c0_i32_3 = arith.constant 0 : i32
    %9 = vector.broadcast %c0_i32_3 : i32 to vector<32x1xi32>
    %10 = arith.cmpi slt, %6, %9 : vector<32x1xi32>
    %c0_i32_4 = arith.constant 0 : i32
    %11 = arith.cmpi slt, %4, %c0_i32_4 : i32
    %12 = vector.broadcast %11 : i1 to vector<32x1xi1>
    %13 = vector.broadcast %12 : vector<32x1xi1> to vector<32x1xi1>
    %14 = arith.xori %10, %13 : vector<32x1xi1>
    %15 = arith.andi %14, %8 : vector<32x1xi1>
    %16 = vector.broadcast %4 : i32 to vector<32x1xi32>
    %17 = arith.addi %6, %16 : vector<32x1xi32>
    %18 = arith.select %15, %17, %6 : vector<32x1xi1>, vector<32x1xi32>
    %c0_i32_5 = arith.constant 0 : i32
    %19 = vector.broadcast %c0_i32_5 : i32 to vector<32x1xi32>
    %20 = arith.cmpi eq, %18, %19 : vector<32x1xi32>
    %c16_i32_6 = arith.constant 16 : i32
    %c0_i32_7 = arith.constant 0 : i32
    %21 = arith.cmpi eq, %c16_i32_6, %c0_i32_7 : i32
    %c1_i32_8 = arith.constant 1 : i32
    %22 = arith.select %21, %c1_i32_8, %c16_i32_6 : i32
    %23 = vector.broadcast %22 : i32 to vector<32x1xi32>
    %24 = arith.remsi %2, %23 : vector<32x1xi32>
    %c0_i32_9 = arith.constant 0 : i32
    %25 = vector.broadcast %c0_i32_9 : i32 to vector<32x1xi32>
    %26 = arith.cmpi ne, %24, %25 : vector<32x1xi32>
    %c0_i32_10 = arith.constant 0 : i32
    %27 = vector.broadcast %c0_i32_10 : i32 to vector<32x1xi32>
    %28 = arith.cmpi slt, %24, %27 : vector<32x1xi32>
    %c0_i32_11 = arith.constant 0 : i32
    %29 = arith.cmpi slt, %22, %c0_i32_11 : i32
    %30 = vector.broadcast %29 : i1 to vector<32x1xi1>
    %31 = vector.broadcast %30 : vector<32x1xi1> to vector<32x1xi1>
    %32 = arith.xori %28, %31 : vector<32x1xi1>
    %33 = arith.andi %32, %26 : vector<32x1xi1>
    %34 = vector.broadcast %22 : i32 to vector<32x1xi32>
    %35 = arith.addi %24, %34 : vector<32x1xi32>
    %36 = arith.select %33, %35, %24 : vector<32x1xi1>, vector<32x1xi32>
    %c15_i32 = arith.constant 15 : i32
    %37 = vector.broadcast %c15_i32 : i32 to vector<32x1xi32>
    %38 = arith.cmpi eq, %36, %37 : vector<32x1xi32>
    %c0_12 = arith.constant 0 : index
    %c0_13 = arith.constant 0 : index
    %39 = vector.load %arg3[%c0_12, %c0_13] : memref<1x128xf32, #tpu.memory_space<vmem>>, vector<1x128xf32>
    %c0_14 = arith.constant 0 : index
    %c0_15 = arith.constant 0 : index
    %40 = vector.load %arg5[%c0_14, %c0_15] : memref<1x128xf32, #tpu.memory_space<vmem>>, vector<1x128xf32>
    %c1_i32_16 = arith.constant 1 : i32
    %41 = tpu.dynamic_rotate %1 by %c1_i32_16 dim 0 : vector<32x128xf32>, i32 -> vector<32x128xf32>
    %cst = arith.constant 0.000000e+00 : f32
    %42 = vector.shape_cast %20 : vector<32x1xi1> to vector<32x1xi1>
    %43 = vector.broadcast %42 : vector<32x1xi1> to vector<32x128xi1>
    %44 = vector.broadcast %cst : f32 to vector<32x128xf32>
    %45 = arith.select %43, %44, %41 : vector<32x128xi1>, vector<32x128xf32>
    %c31_i32 = arith.constant 31 : i32
    %46 = tpu.dynamic_rotate %1 by %c31_i32 dim 0 : vector<32x128xf32>, i32 -> vector<32x128xf32>
    %cst_17 = arith.constant 0.000000e+00 : f32
    %47 = vector.shape_cast %38 : vector<32x1xi1> to vector<32x1xi1>
    %48 = vector.broadcast %47 : vector<32x1xi1> to vector<32x128xi1>
    %49 = vector.broadcast %cst_17 : f32 to vector<32x128xf32>
    %50 = arith.select %48, %49, %46 : vector<32x128xi1>, vector<32x128xf32>
    %c0_18 = arith.constant 0 : index
    %c0_19 = arith.constant 0 : index
    %c0_20 = arith.constant 0 : index
    %51 = vector.load %arg2[%c0_18, %c0_19, %c0_20] : memref<3x128x128xf32, #tpu.memory_space<vmem>>, vector<1x128x128xf32>
    %52 = vector.shape_cast %51 : vector<1x128x128xf32> to vector<128x128xf32>
    %cst_21 = arith.constant dense<0.000000e+00> : vector<32x128xf32>
    %53 = tpu.matmul %45, %52, %cst_21 {dimension_numbers = #tpu.dot_dimension_numbers<[1], [0], [0], [1], [0, 0, 1, 1], [], []>} : vector<32x128xf32>, vector<128x128xf32>, vector<32x128xf32> -> vector<32x128xf32>
    %c1 = arith.constant 1 : index
    %c0_22 = arith.constant 0 : index
    %c0_23 = arith.constant 0 : index
    %54 = vector.load %arg2[%c1, %c0_22, %c0_23] : memref<3x128x128xf32, #tpu.memory_space<vmem>>, vector<1x128x128xf32>
    %55 = vector.shape_cast %54 : vector<1x128x128xf32> to vector<128x128xf32>
    %cst_24 = arith.constant dense<0.000000e+00> : vector<32x128xf32>
    %56 = tpu.matmul %1, %55, %cst_24 {dimension_numbers = #tpu.dot_dimension_numbers<[1], [0], [0], [1], [0, 0, 1, 1], [], []>} : vector<32x128xf32>, vector<128x128xf32>, vector<32x128xf32> -> vector<32x128xf32>
    %57 = arith.addf %53, %56 : vector<32x128xf32>
    %c2 = arith.constant 2 : index
    %c0_25 = arith.constant 0 : index
    %c0_26 = arith.constant 0 : index
    %58 = vector.load %arg2[%c2, %c0_25, %c0_26] : memref<3x128x128xf32, #tpu.memory_space<vmem>>, vector<1x128x128xf32>
    %59 = vector.shape_cast %58 : vector<1x128x128xf32> to vector<128x128xf32>
    %cst_27 = arith.constant dense<0.000000e+00> : vector<32x128xf32>
    %60 = tpu.matmul %50, %59, %cst_27 {dimension_numbers = #tpu.dot_dimension_numbers<[1], [0], [0], [1], [0, 0, 1, 1], [], []>} : vector<32x128xf32>, vector<128x128xf32>, vector<32x128xf32> -> vector<32x128xf32>
    %61 = arith.addf %57, %60 : vector<32x128xf32>
    %62 = vector.broadcast %39 : vector<1x128xf32> to vector<32x128xf32>
    %63 = arith.addf %61, %62 : vector<32x128xf32>
    %cst_28 = arith.constant 0.000000e+00 : f32
    %64 = vector.broadcast %cst_28 : f32 to vector<32x128xf32>
    %65 = arith.maximumf %63, %64 : vector<32x128xf32>
    %c1_i32_29 = arith.constant 1 : i32
    %66 = tpu.dynamic_rotate %65 by %c1_i32_29 dim 0 : vector<32x128xf32>, i32 -> vector<32x128xf32>
    %cst_30 = arith.constant 0.000000e+00 : f32
    %67 = vector.shape_cast %20 : vector<32x1xi1> to vector<32x1xi1>
    %68 = vector.broadcast %67 : vector<32x1xi1> to vector<32x128xi1>
    %69 = vector.broadcast %cst_30 : f32 to vector<32x128xf32>
    %70 = arith.select %68, %69, %66 : vector<32x128xi1>, vector<32x128xf32>
    %c31_i32_31 = arith.constant 31 : i32
    %71 = tpu.dynamic_rotate %65 by %c31_i32_31 dim 0 : vector<32x128xf32>, i32 -> vector<32x128xf32>
    %cst_32 = arith.constant 0.000000e+00 : f32
    %72 = vector.shape_cast %38 : vector<32x1xi1> to vector<32x1xi1>
    %73 = vector.broadcast %72 : vector<32x1xi1> to vector<32x128xi1>
    %74 = vector.broadcast %cst_32 : f32 to vector<32x128xf32>
    %75 = arith.select %73, %74, %71 : vector<32x128xi1>, vector<32x128xf32>
    %c0_33 = arith.constant 0 : index
    %c0_34 = arith.constant 0 : index
    %c0_35 = arith.constant 0 : index
    %76 = vector.load %arg4[%c0_33, %c0_34, %c0_35] : memref<3x128x128xf32, #tpu.memory_space<vmem>>, vector<1x128x128xf32>
    %77 = vector.shape_cast %76 : vector<1x128x128xf32> to vector<128x128xf32>
    %cst_36 = arith.constant dense<0.000000e+00> : vector<32x128xf32>
    %78 = tpu.matmul %70, %77, %cst_36 {dimension_numbers = #tpu.dot_dimension_numbers<[1], [0], [0], [1], [0, 0, 1, 1], [], []>} : vector<32x128xf32>, vector<128x128xf32>, vector<32x128xf32> -> vector<32x128xf32>
    %c1_37 = arith.constant 1 : index
    %c0_38 = arith.constant 0 : index
    %c0_39 = arith.constant 0 : index
    %79 = vector.load %arg4[%c1_37, %c0_38, %c0_39] : memref<3x128x128xf32, #tpu.memory_space<vmem>>, vector<1x128x128xf32>
    %80 = vector.shape_cast %79 : vector<1x128x128xf32> to vector<128x128xf32>
    %cst_40 = arith.constant dense<0.000000e+00> : vector<32x128xf32>
    %81 = tpu.matmul %65, %80, %cst_40 {dimension_numbers = #tpu.dot_dimension_numbers<[1], [0], [0], [1], [0, 0, 1, 1], [], []>} : vector<32x128xf32>, vector<128x128xf32>, vector<32x128xf32> -> vector<32x128xf32>
    %82 = arith.addf %78, %81 : vector<32x128xf32>
    %c2_41 = arith.constant 2 : index
    %c0_42 = arith.constant 0 : index
    %c0_43 = arith.constant 0 : index
    %83 = vector.load %arg4[%c2_41, %c0_42, %c0_43] : memref<3x128x128xf32, #tpu.memory_space<vmem>>, vector<1x128x128xf32>
    %84 = vector.shape_cast %83 : vector<1x128x128xf32> to vector<128x128xf32>
    %cst_44 = arith.constant dense<0.000000e+00> : vector<32x128xf32>
    %85 = tpu.matmul %75, %84, %cst_44 {dimension_numbers = #tpu.dot_dimension_numbers<[1], [0], [0], [1], [0, 0, 1, 1], [], []>} : vector<32x128xf32>, vector<128x128xf32>, vector<32x128xf32> -> vector<32x128xf32>
    %86 = arith.addf %82, %85 : vector<32x128xf32>
    %87 = vector.broadcast %40 : vector<1x128xf32> to vector<32x128xf32>
    %88 = arith.addf %86, %87 : vector<32x128xf32>
    %89 = arith.addf %88, %1 : vector<32x128xf32>
    %cst_45 = arith.constant 0.000000e+00 : f32
    %90 = vector.broadcast %cst_45 : f32 to vector<32x128xf32>
    %91 = arith.maximumf %89, %90 : vector<32x128xf32>
    %92 = vector.shape_cast %91 : vector<32x128xf32> to vector<2x16x128xf32>
    %c0_46 = arith.constant 0 : index
    %c0_47 = arith.constant 0 : index
    %c0_48 = arith.constant 0 : index
    %93 = vector.load %arg6[%c0_46, %c0_47, %c0_48] : memref<2x16x128xf32, #tpu.memory_space<vmem>>, vector<2x16x128xf32>
    tpu.vector_store %arg6[%c0_46, %c0_47, %c0_48], %92 {strides = array<i32>} : memref<2x16x128xf32, #tpu.memory_space<vmem>>, vector<2x16x128xf32>,
    return
  }
  func.func @transform_0(%arg0: i32) -> (i32, i32, i32) {
    %c0_i32 = arith.constant 0 : i32
    %c0_i32_0 = arith.constant 0 : i32
    %c0_i32_1 = arith.constant 0 : i32
    return %arg0, %c0_i32, %c0_i32_0 : i32, i32, i32
  }
  func.func @transform_1(%arg0: i32) -> (i32, i32, i32) {
    %c0_i32 = arith.constant 0 : i32
    %c0_i32_0 = arith.constant 0 : i32
    %c0_i32_1 = arith.constant 0 : i32
    %c0_i32_2 = arith.constant 0 : i32
    return %c0_i32, %c0_i32_0, %c0_i32_1 : i32, i32, i32
  }
  func.func @transform_2(%arg0: i32) -> (i32, i32) {
    %c0_i32 = arith.constant 0 : i32
    %c0_i32_0 = arith.constant 0 : i32
    %c0_i32_1 = arith.constant 0 : i32
    return %c0_i32, %c0_i32_0 : i32, i32
  }
  func.func @transform_3(%arg0: i32) -> (i32, i32, i32) {
    %c0_i32 = arith.constant 0 : i32
    %c0_i32_0 = arith.constant 0 : i32
    %c0_i32_1 = arith.constant 0 : i32
    %c0_i32_2 = arith.constant 0 : i32
    return %c0_i32, %c0_i32_0, %c0_i32_1 : i32, i32, i32
  }
  func.func @transform_4(%arg0: i32) -> (i32, i32) {
    %c0_i32 = arith.constant 0 : i32
    %c0_i32_0 = arith.constant 0 : i32
    %c0_i32_1 = arith.constant 0 : i32
    return %c0_i32, %c0_i32_0 : i32, i32
  }
  func.func @transform_5(%arg0: i32) -> (i32, i32, i32) {
    %c0_i32 = arith.constant 0 : i32
    %c0_i32_0 = arith.constant 0 : i32
    %c0_i32_1 = arith.constant 0 : i32
    return %arg0, %c0_i32, %c0_i32_0 : i32, i32, i32
  }
}

</mosaic_0001>

<llo_original>
// kernel: tile.28
$region0: #{tile.28}
  #allocation0 [shape = 's32[1]{0}', space=sflag, size = 0x4, scoped, tag = 'scoped memory for tile.28']
  %s0 = inlined_call_operand.vmem [shape: f32[8], index: 0, kind: input, shape index: {}]
  %s1 = inlined_call_operand.vmem [shape: f32[16,8], index: 1, kind: output, shape index: {}]
  // Predicated region
  $region2: #{tile.28} parent=0 // pred_check
    _
  $region3: #{tile.28} parent=0 // pred_check_branch
    %3 = sbr.rel (0) target = $region5
  $region4: #{tile.28} parent=0 // pred_region
    _
  $region5: #{tile.28} parent=0 // pred_fallthru
    _
  %v4 = vld [vmem:[%s0] ss:$0 sm:$0xff]
  %5 = vst [vmem:[%s1] sm:$0xff] %v4
  %s6 = scalar_lea.vmem %s1, 8
  %7 = vst [vmem:[%s6] sm:$0xff] %v4

// kernel: mul.31
$region0: #{mul.31}
  %s0 = inlined_call_operand.vmem [shape: f32[16,8], index: 0, kind: input, shape index: {}]
  %s1 = inlined_call_operand.vmem [shape: f32[128], index: 1, kind: output, shape index: {}]
  $region1: #{mul.31} parent=0
    #allocation0 [shape = 'u8[4096]{0}', space=vmem, size = 0x1000, scoped, tag = 'scoped mem for output reshape']
    %v2 = vld [vmem:[%s0] sm:$0x1]
    %vm3 = vcmask 64512
    %4 = vst.msk [vmem:[#allocation0] sm:$0x1] %vm3, %v2
    %s5 = scalar_lea.vmem %s0, 15
    %v6 = vld [vmem:[%s5] sm:$0x1]
    %7 = vrot.lane.b32.xlu0 %v6, 120
    %v8 = vpop.permute.xlu0 %7
    %vm9 = vcmask 1048512
    %10 = vst.msk [vmem:[#allocation0] sm:$0x1] %vm9, %v8
    %s11 = scalar_lea.vmem %s0, 14
    %v12 = vld [vmem:[%s11] sm:$0x1]
    %13 = vrot.lane.b32.xlu0 %v12, 112
    %v14 = vpop.permute.xlu0 %13
    %vm15 = vcmask 982912
    %16 = vst.msk [vmem:[#allocation0] sm:$0x1] %vm15, %v14
    %s17 = scalar_lea.vmem %s0, 13
    %v18 = vld [vmem:[%s17] sm:$0x1]
    %19 = vrot.lane.b32.xlu0 %v18, 104
    %v20 = vpop.permute.xlu0 %19
    %vm21 = vcmask 917312
    %22 = vst.msk [vmem:[#allocation0] sm:$0x1] %vm21, %v20
    %s23 = scalar_lea.vmem %s0, 12
    %v24 = vld [vmem:[%s23] sm:$0x1]
    %25 = vrot.lane.b32.xlu0 %v24, 96
    %v26 = vpop.permute.xlu0 %25
    %vm27 = vcmask 851712
    %28 = vst.msk [vmem:[#allocation0] sm:$0x1] %vm27, %v26
    %s29 = scalar_lea.vmem %s0, 11
    %v30 = vld [vmem:[%s29] sm:$0x1]
    %31 = vrot.lane.b32.xlu0 %v30, 88
    %v32 = vpop.permute.xlu0 %31
    %vm33 = vcmask 786112
    %34 = vst.msk [vmem:[#allocation0] sm:$0x1] %vm33, %v32
    %s35 = scalar_lea.vmem %s0, 10
    %v36 = vld [vmem:[%s35] sm:$0x1]
    %37 = vrot.lane.b32.xlu0 %v36, 80
    %v38 = vpop.permute.xlu0 %37
    %vm39 = vcmask 720512
    %40 = vst.msk [vmem:[#allocation0] sm:$0x1] %vm39, %v38
    %s41 = scalar_lea.vmem %s0, 9
    %v42 = vld [vmem:[%s41] sm:$0x1]
    %43 = vrot.lane.b32.xlu0 %v42, 72
    %v44 = vpop.permute.xlu0 %43
    %vm45 = vcmask 654912
    %46 = vst.msk [vmem:[#allocation0] sm:$0x1] %vm45, %v44
    %s47 = scalar_lea.vmem %s0, 8
    %v48 = vld [vmem:[%s47] sm:$0x1]
    %49 = vrot.lane.b32.xlu0 %v48, 64
    %v50 = vpop.permute.xlu0 %49
    %vm51 = vcmask 589312
    %52 = vst.msk [vmem:[#allocation0] sm:$0x1] %vm51, %v50
    %s53 = scalar_lea.vmem %s0, 7
    %v54 = vld [vmem:[%s53] sm:$0x1]
    %55 = vrot.lane.b32.xlu0 %v54, 56
    %v56 = vpop.permute.xlu0 %55
    %vm57 = vcmask 523712
    %58 = vst.msk [vmem:[#allocation0] sm:$0x1] %vm57, %v56
    %s59 = scalar_lea.vmem %s0, 6
    %v60 = vld [vmem:[%s59] sm:$0x1]
    %61 = vrot.lane.b32.xlu0 %v60, 48
    %v62 = vpop.permute.xlu0 %61
    %vm63 = vcmask 458112
    %64 = vst.msk [vmem:[#allocation0] sm:$0x1] %vm63, %v62
    %s65 = scalar_lea.vmem %s0, 5
    %v66 = vld [vmem:[%s65] sm:$0x1]
    %67 = vrot.lane.b32.xlu0 %v66, 40
    %v68 = vpop.permute.xlu0 %67
    %vm69 = vcmask 392512
    %70 = vst.msk [vmem:[#allocation0] sm:$0x1] %vm69, %v68
    %s71 = scalar_lea.vmem %s0, 4
    %v72 = vld [vmem:[%s71] sm:$0x1]
    %73 = vrot.lane.b32.xlu0 %v72, 32
    %v74 = vpop.permute.xlu0 %73
    %vm75 = vcmask 326912
    %76 = vst.msk [vmem:[#allocation0] sm:$0x1] %vm75, %v74
    %s77 = scalar_lea.vmem %s0, 3
    %v78 = vld [vmem:[%s77] sm:$0x1]
    %79 = vrot.lane.b32.xlu0 %v78, 24
    %v80 = vpop.permute.xlu0 %79
    %vm81 = vcmask 261312
    %82 = vst.msk [vmem:[#allocation0] sm:$0x1] %vm81, %v80
    %s83 = scalar_lea.vmem %s0, 2
    %v84 = vld [vmem:[%s83] sm:$0x1]
    %85 = vrot.lane.b32.xlu0 %v84, 16
    %v86 = vpop.permute.xlu0 %85
    %vm87 = vcmask 195712
    %88 = vst.msk [vmem:[#allocation0] sm:$0x1] %vm87, %v86
    %s89 = scalar_lea.vmem %s0, 1
    %v90 = vld [vmem:[%s89] sm:$0x1]
    %91 = vrot.lane.b32.xlu0 %v90, 8
    %v92 = vpop.permute.xlu0 %91
    %vm93 = vcmask 130112
    %94 = vst.msk [vmem:[#allocation0] sm:$0x1] %vm93, %v92
    %s96 = sshllo.u32 0, 1
    %v98 = vld [vmem:[#allocation0] sm:%s96]
    %s99 = sshllo.u32 0, 1
    %100 = vst [vmem:[%s1] sm:%s99] %v98

// kernel: tile.34
$region0: #{tile.34}
  %s0 = inlined_call_operand.vmem [shape: f32[16,8], index: 0, kind: input, shape index: {}]
  %s1 = inlined_call_operand.vmem [shape: f32[1,128], index: 1, kind: output, shape index: {}]
  $region1: #{tile.34} parent=0
    #allocation0 [shape = 'u8[4096]{0}', space=vmem, size = 0x1000, scoped, tag = 'scoped mem for output reshape']
    %v2 = vld [vmem:[%s0] sm:$0x1]
    %vm3 = vcmask 64512
    %4 = vst.msk [vmem:[#allocation0] sm:$0x1] %vm3, %v2
    %s5 = scalar_lea.vmem %s0, 15
    %v6 = vld [vmem:[%s5] sm:$0x1]
    %7 = vrot.lane.b32.xlu0 %v6, 120
    %v8 = vpop.permute.xlu0 %7
    %vm9 = vcmask 1048512
    %10 = vst.msk [vmem:[#allocation0] sm:$0x1] %vm9, %v8
    %s11 = scalar_lea.vmem %s0, 14
    %v12 = vld [vmem:[%s11] sm:$0x1]
    %13 = vrot.lane.b32.xlu0 %v12, 112
    %v14 = vpop.permute.xlu0 %13
    %vm15 = vcmask 982912
    %16 = vst.msk [vmem:[#allocation0] sm:$0x1] %vm15, %v14
    %s17 = scalar_lea.vmem %s0, 13
    %v18 = vld [vmem:[%s17] sm:$0x1]
    %19 = vrot.lane.b32.xlu0 %v18, 104
    %v20 = vpop.permute.xlu0 %19
    %vm21 = vcmask 917312
    %22 = vst.msk [vmem:[#allocation0] sm:$0x1] %vm21, %v20
    %s23 = scalar_lea.vmem %s0, 12
    %v24 = vld [vmem:[%s23] sm:$0x1]
    %25 = vrot.lane.b32.xlu0 %v24, 96
    %v26 = vpop.permute.xlu0 %25
    %vm27 = vcmask 851712
    %28 = vst.msk [vmem:[#allocation0] sm:$0x1] %vm27, %v26
    %s29 = scalar_lea.vmem %s0, 11
    %v30 = vld [vmem:[%s29] sm:$0x1]
    %31 = vrot.lane.b32.xlu0 %v30, 88
    %v32 = vpop.permute.xlu0 %31
    %vm33 = vcmask 786112
    %34 = vst.msk [vmem:[#allocation0] sm:$0x1] %vm33, %v32
    %s35 = scalar_lea.vmem %s0, 10
    %v36 = vld [vmem:[%s35] sm:$0x1]
    %37 = vrot.lane.b32.xlu0 %v36, 80
    %v38 = vpop.permute.xlu0 %37
    %vm39 = vcmask 720512
    %40 = vst.msk [vmem:[#allocation0] sm:$0x1] %vm39, %v38
    %s41 = scalar_lea.vmem %s0, 9
    %v42 = vld [vmem:[%s41] sm:$0x1]
    %43 = vrot.lane.b32.xlu0 %v42, 72
    %v44 = vpop.permute.xlu0 %43
    %vm45 = vcmask 654912
    %46 = vst.msk [vmem:[#allocation0] sm:$0x1] %vm45, %v44
    %s47 = scalar_lea.vmem %s0, 8
    %v48 = vld [vmem:[%s47] sm:$0x1]
    %49 = vrot.lane.b32.xlu0 %v48, 64
    %v50 = vpop.permute.xlu0 %49
    %vm51 = vcmask 589312
    %52 = vst.msk [vmem:[#allocation0] sm:$0x1] %vm51, %v50
    %s53 = scalar_lea.vmem %s0, 7
    %v54 = vld [vmem:[%s53] sm:$0x1]
    %55 = vrot.lane.b32.xlu0 %v54, 56
    %v56 = vpop.permute.xlu0 %55
    %vm57 = vcmask 523712
    %58 = vst.msk [vmem:[#allocation0] sm:$0x1] %vm57, %v56
    %s59 = scalar_lea.vmem %s0, 6
    %v60 = vld [vmem:[%s59] sm:$0x1]
    %61 = vrot.lane.b32.xlu0 %v60, 48
    %v62 = vpop.permute.xlu0 %61
    %vm63 = vcmask 458112
    %64 = vst.msk [vmem:[#allocation0] sm:$0x1] %vm63, %v62
    %s65 = scalar_lea.vmem %s0, 5
    %v66 = vld [vmem:[%s65] sm:$0x1]
    %67 = vrot.lane.b32.xlu0 %v66, 40
    %v68 = vpop.permute.xlu0 %67
    %vm69 = vcmask 392512
    %70 = vst.msk [vmem:[#allocation0] sm:$0x1] %vm69, %v68
    %s71 = scalar_lea.vmem %s0, 4
    %v72 = vld [vmem:[%s71] sm:$0x1]
    %73 = vrot.lane.b32.xlu0 %v72, 32
    %v74 = vpop.permute.xlu0 %73
    %vm75 = vcmask 326912
    %76 = vst.msk [vmem:[#allocation0] sm:$0x1] %vm75, %v74
    %s77 = scalar_lea.vmem %s0, 3
    %v78 = vld [vmem:[%s77] sm:$0x1]
    %79 = vrot.lane.b32.xlu0 %v78, 24
    %v80 = vpop.permute.xlu0 %79
    %vm81 = vcmask 261312
    %82 = vst.msk [vmem:[#allocation0] sm:$0x1] %vm81, %v80
    %s83 = scalar_lea.vmem %s0, 2
    %v84 = vld [vmem:[%s83] sm:$0x1]
    %85 = vrot.lane.b32.xlu0 %v84, 16
    %v86 = vpop.permute.xlu0 %85
    %vm87 = vcmask 195712
    %88 = vst.msk [vmem:[#allocation0] sm:$0x1] %vm87, %v86
    %s89 = scalar_lea.vmem %s0, 1
    %v90 = vld [vmem:[%s89] sm:$0x1]
    %91 = vrot.lane.b32.xlu0 %v90, 8
    %v92 = vpop.permute.xlu0 %91
    %vm93 = vcmask 130112
    %94 = vst.msk [vmem:[#allocation0] sm:$0x1] %vm93, %v92
    %s96 = sshllo.u32 0, 1
    %v98 = vld [vmem:[#allocation0] sm:%s96]
    %s99 = sshllo.u32 0, 1
    %100 = vst [vmem:[%s1] sm:%s99] %v98

// kernel: basic_block_forward.1
$region0: #{basic_block_forward.1}
  #allocation0 [shape = 'u32[]', space=smem, size = 0x4, offset = 0x4, fixed_abs, tag = 'smem constant byte address 0x4 - core index']
  #allocation1 [shape = 'u32[144,128]{1,0:T(1,128)}', space=vmem, size = 0x12000, scoped, tag = 'internal scratch']
  %s0 = inlined_call_operand.vmem [shape: f32[2,16,128], index: 0, kind: input, shape index: {}]
  %s1 = inlined_call_operand.vmem [shape: f32[3,128,128], index: 1, kind: input, shape index: {}]
  %s2 = inlined_call_operand.vmem [shape: f32[1,128], index: 2, kind: input, shape index: {}]
  %s3 = inlined_call_operand.vmem [shape: f32[3,128,128], index: 3, kind: input, shape index: {}]
  %s4 = inlined_call_operand.vmem [shape: f32[1,128], index: 4, kind: input, shape index: {}]
  %s5 = inlined_call_operand.vmem [shape: f32[2,16,128], index: 5, kind: output, shape index: {}]
  %s6 = sld [smem:[#allocation0]]
  $region30: #{basic_block_forward.1} parent=0
    _
  %s8 = ssub.s32 1, %s6
  %s9 = scalar_select 0, %s8, %s6
  // Predicated region
  $region2: #{basic_block_forward.1} parent=0 // pred_check
    _
  $region3: #{basic_block_forward.1} parent=0 // pred_check_branch
    %11 = sbr.rel (0) target = $region5
  $region4: #{basic_block_forward.1} parent=0 // pred_region
    _
  $region5: #{basic_block_forward.1} parent=0 // pred_fallthru
    _
  // Predicated region
  $region6: #{basic_block_forward.1} parent=0 // pred_check
    _
  $region7: #{basic_block_forward.1} parent=0 // pred_check_branch
    %13 = sbr.rel (0) target = $region9
  $region8: #{basic_block_forward.1} parent=0 // pred_region
    _
  $region9: #{basic_block_forward.1} parent=0 // pred_fallthru
    _
  // Predicated region
  $region10: #{basic_block_forward.1} parent=0 // pred_check
    _
  $region11: #{basic_block_forward.1} parent=0 // pred_check_branch
    %15 = sbr.rel (0) target = $region13
  $region12: #{basic_block_forward.1} parent=0 // pred_region
    _
  $region13: #{basic_block_forward.1} parent=0 // pred_fallthru
    _
  // Predicated region
  $region14: #{basic_block_forward.1} parent=0 // pred_check
    _
  $region15: #{basic_block_forward.1} parent=0 // pred_check_branch
    %17 = sbr.rel (0) target = $region17
  $region16: #{basic_block_forward.1} parent=0 // pred_region
    _
  $region17: #{basic_block_forward.1} parent=0 // pred_fallthru
    _
  // Predicated region
  $region18: #{basic_block_forward.1} parent=0 // pred_check
    _
  $region19: #{basic_block_forward.1} parent=0 // pred_check_branch
    %19 = sbr.rel (0) target = $region21
  $region20: #{basic_block_forward.1} parent=0 // pred_region
    _
  $region21: #{basic_block_forward.1} parent=0 // pred_fallthru
    _
  %v20 = vld [vmem:[%s0] sm:$0xff]
  %v21 = vld [vmem:[%s0 + $0x8] sm:$0xff]
  %v22 = vld [vmem:[%s0 + $0x10] sm:$0xff]
  %v23 = vld [vmem:[%s0 + $0x18] sm:$0xff]
  %v24 = vlaneseq
  %v25 = vshrl.u32 %v24, 7
  %v26 = vadd.s32 %v25, 8
  %v27 = vadd.s32 %v25, 16
  %v28 = vadd.s32 %v25, 24
  %vm29 = vcmp.lt.s32.totalorder %v25, 0
  %v30 = vsub.s32 0, %v25
  %v31 = vsel %vm29, %v30, %v25
  %v32 = vshrl.u32 %v31, 4
  %v33 = vand.u32 %v31, 15
  %v34 = vsub.s32 0, %v33
  %v35 = vsel %vm29, %v34, %v33
  %vm36 = vcmp.lt.s32.totalorder %v26, 0
  %v37 = vsub.s32 0, %v26
  %v38 = vsel %vm36, %v37, %v26
  %v39 = vshrl.u32 %v38, 4
  %v40 = vand.u32 %v38, 15
  %v41 = vsub.s32 0, %v40
  %v42 = vsel %vm36, %v41, %v40
  %vm43 = vcmp.lt.s32.totalorder %v27, 0
  %v44 = vsub.s32 0, %v27
  %v45 = vsel %vm43, %v44, %v27
  %v46 = vshrl.u32 %v45, 4
  %v47 = vand.u32 %v45, 15
  %v48 = vsub.s32 0, %v47
  %v49 = vsel %vm43, %v48, %v47
  %vm50 = vcmp.lt.s32.totalorder %v28, 0
  %v51 = vsub.s32 0, %v28
  %v52 = vsel %vm50, %v51, %v28
  %v53 = vshrl.u32 %v52, 4
  %v54 = vand.u32 %v52, 15
  %v55 = vsub.s32 0, %v54
  %v56 = vsel %vm50, %v55, %v54
  %vm57 = vcmp.ne.s32.totalorder %v35, 0
  %vm58 = vcmp.ne.s32.totalorder %v42, 0
  %vm59 = vcmp.ne.s32.totalorder %v49, 0
  %vm60 = vcmp.ne.s32.totalorder %v56, 0
  %vm61 = vcmp.lt.s32.totalorder %v35, 0
  %vm62 = vcmp.lt.s32.totalorder %v42, 0
  %vm63 = vcmp.lt.s32.totalorder %v49, 0
  %vm64 = vcmp.lt.s32.totalorder %v56, 0
  %vm65 = vmand %vm61, %vm57
  %vm66 = vmand %vm62, %vm58
  %vm67 = vmand %vm63, %vm59
  %vm68 = vmand %vm64, %vm60
  %v69 = vadd.s32 %v35, 16
  %v70 = vadd.s32 %v42, 16
  %v71 = vadd.s32 %v49, 16
  %v72 = vadd.s32 %v56, 16
  %v73 = vsel %vm65, %v69, %v35
  %v74 = vsel %vm66, %v70, %v42
  %v75 = vsel %vm67, %v71, %v49
  %v76 = vsel %vm68, %v72, %v56
  %vm77 = vcmp.eq.s32.totalorder %v73, 0
  %vm78 = vcmp.eq.s32.totalorder %v74, 0
  %vm79 = vcmp.eq.s32.totalorder %v75, 0
  %vm80 = vcmp.eq.s32.totalorder %v76, 0
  %vm81 = vcmp.eq.s32.totalorder %v73, 15
  %vm82 = vcmp.eq.s32.totalorder %v74, 15
  %vm83 = vcmp.eq.s32.totalorder %v75, 15
  %vm84 = vcmp.eq.s32.totalorder %v76, 15
  %v85 = vld [vmem:[%s2] sm:$0x1]
  %v86 = vld [vmem:[%s4] sm:$0x1]
  %v87 = vrot.slane %v20, 7
  %v88 = vrot.slane %v21, 7
  %v89 = vrot.slane %v22, 7
  %v90 = vrot.slane %v23, 7
  %vm91 = vcmp.lt.s32.totalorder %v25, 1
  %v92 = vsel %vm91, %v89, %v90
  %v93 = vsel %vm91, %v88, %v89
  %v94 = vsel %vm91, %v87, %v88
  %v95 = vsel %vm91, %v90, %v87
  %v96 = vsel %vm77, 1, 0
  %v97 = vsel %vm78, 1, 0
  %v98 = vsel %vm79, 1, 0
  %v99 = vsel %vm80, 1, 0
  %vm100 = vcmp.eq.s32.totalorder %v96, 1
  %vm101 = vcmp.eq.s32.totalorder %v97, 1
  %vm102 = vcmp.eq.s32.totalorder %v98, 1
  %vm103 = vcmp.eq.s32.totalorder %v99, 1
  %v104 = vsel %vm100, 0.0, %v95
  %v105 = vsel %vm101, 0.0, %v94
  %v106 = vsel %vm102, 0.0, %v93
  %v107 = vsel %vm103, 0.0, %v92
  %v108 = vrot.slane %v20, 1
  %v109 = vrot.slane %v21, 1
  %v110 = vrot.slane %v22, 1
  %v111 = vrot.slane %v23, 1
  %vm112 = vcmp.lt.s32.totalorder %v25, 7
  %v113 = vsel %vm112, %v110, %v111
  %v114 = vsel %vm112, %v109, %v110
  %v115 = vsel %vm112, %v108, %v109
  %v116 = vsel %vm112, %v111, %v108
  %v117 = vsel %vm81, 1, 0
  %v118 = vsel %vm82, 1, 0
  %v119 = vsel %vm83, 1, 0
  %v120 = vsel %vm84, 1, 0
  %vm121 = vcmp.eq.s32.totalorder %v117, 1
  %vm122 = vcmp.eq.s32.totalorder %v118, 1
  %vm123 = vcmp.eq.s32.totalorder %v119, 1
  %vm124 = vcmp.eq.s32.totalorder %v120, 1
  %v125 = vsel %vm121, 0.0, %v115
  %v126 = vsel %vm122, 0.0, %v114
  %v127 = vsel %vm123, 0.0, %v113
  %v128 = vsel %vm124, 0.0, %v116
  %v129 = vld [vmem:[%s1] sm:$0xff]
  %v130 = vld [vmem:[%s1 + $0x8] sm:$0xff]
  %v131 = vld [vmem:[%s1 + $0x10] sm:$0xff]
  %v132 = vld [vmem:[%s1 + $0x18] sm:$0xff]
  %v133 = vld [vmem:[%s1 + $0x20] sm:$0xff]
  %v134 = vld [vmem:[%s1 + $0x28] sm:$0xff]
  %v135 = vld [vmem:[%s1 + $0x30] sm:$0xff]
  %v136 = vld [vmem:[%s1 + $0x38] sm:$0xff]
  %v137 = vld [vmem:[%s1 + $0x40] sm:$0xff]
  %v138 = vld [vmem:[%s1 + $0x48] sm:$0xff]
  %v139 = vld [vmem:[%s1 + $0x50] sm:$0xff]
  %v140 = vld [vmem:[%s1 + $0x58] sm:$0xff]
  %v141 = vld [vmem:[%s1 + $0x60] sm:$0xff]
  %v142 = vld [vmem:[%s1 + $0x68] sm:$0xff]
  %v143 = vld [vmem:[%s1 + $0x70] sm:$0xff]
  %v144 = vld [vmem:[%s1 + $0x78] sm:$0xff]
  %s145 = scalar_lea.vmem %s1, 128
  %v146 = vld [vmem:[%s145] sm:$0xff]
  %v147 = vld [vmem:[%s145 + $0x8] sm:$0xff]
  %v148 = vld [vmem:[%s145 + $0x10] sm:$0xff]
  %v149 = vld [vmem:[%s145 + $0x18] sm:$0xff]
  %v150 = vld [vmem:[%s145 + $0x20] sm:$0xff]
  %v151 = vld [vmem:[%s145 + $0x28] sm:$0xff]
  %v152 = vld [vmem:[%s145 + $0x30] sm:$0xff]
  %v153 = vld [vmem:[%s145 + $0x38] sm:$0xff]
  %v154 = vld [vmem:[%s145 + $0x40] sm:$0xff]
  %v155 = vld [vmem:[%s145 + $0x48] sm:$0xff]
  %v156 = vld [vmem:[%s145 + $0x50] sm:$0xff]
  %v157 = vld [vmem:[%s145 + $0x58] sm:$0xff]
  %v158 = vld [vmem:[%s145 + $0x60] sm:$0xff]
  %v159 = vld [vmem:[%s145 + $0x68] sm:$0xff]
  %v160 = vld [vmem:[%s145 + $0x70] sm:$0xff]
  %v161 = vld [vmem:[%s145 + $0x78] sm:$0xff]
  %162 = vmatprep.subr.mxu0 0.0
  %163 = vmatpush1.msra.mxu0 %v146
  %164 = vmatprep.subr.mxu0 0.0
  %165 = vmatpush1.msra.mxu0 %v147
  %166 = vmatprep.subr.mxu0 0.0
  %167 = vmatpush1.msra.mxu0 %v148
  %168 = vmatprep.subr.mxu0 0.0
  %169 = vmatpush1.msra.mxu0 %v149
  %170 = vmatprep.subr.mxu0 0.0
  %171 = vmatpush1.msra.mxu0 %v150
  %172 = vmatprep.subr.mxu0 0.0
  %173 = vmatpush1.msra.mxu0 %v151
  %174 = vmatprep.subr.mxu0 0.0
  %175 = vmatpush1.msra.mxu0 %v152
  %176 = vmatprep.subr.mxu0 0.0
  %177 = vmatpush1.msra.mxu0 %v153
  %178 = vmatprep.subr.mxu0 0.0
  %179 = vmatpush1.msra.mxu0 %v154
  %180 = vmatprep.subr.mxu0 0.0
  %181 = vmatpush1.msra.mxu0 %v155
  %182 = vmatprep.subr.mxu0 0.0
  %183 = vmatpush1.msra.mxu0 %v156
  %184 = vmatprep.subr.mxu0 0.0
  %185 = vmatpush1.msra.mxu0 %v157
  %186 = vmatprep.subr.mxu0 0.0
  %187 = vmatpush1.msra.mxu0 %v158
  %188 = vmatprep.subr.mxu0 0.0
  %189 = vmatpush1.msra.mxu0 %v159
  %190 = vmatprep.subr.mxu0 0.0
  %191 = vmatpush1.msra.mxu0 %v160
  %192 = vmatprep.subr.mxu0 0.0
  %193 = vmatpush1.msra.mxu0 %v161
  %194 = vmatprep.subr.mxu0 0.0
  %195 = vmatpush1.msra.mxu0 0.0
  %196 = vmatprep.subr.mxu0 0.0
  %197 = vmatpush1.msra.mxu0 0.0
  %198 = vmatprep.subr.mxu0 0.0
  %199 = vmatpush1.msra.mxu0 0.0
  %200 = vmatprep.subr.mxu0 0.0
  %201 = vmatpush1.msra.mxu0 0.0
  %202 = vmatprep.subr.mxu0 0.0
  %203 = vmatpush1.msra.mxu0 0.0
  %204 = vmatprep.subr.mxu0 0.0
  %205 = vmatpush1.msra.mxu0 0.0
  %206 = vmatprep.subr.mxu0 0.0
  %207 = vmatpush1.msra.mxu0 0.0
  %208 = vmatprep.subr.mxu0 0.0
  %209 = vmatpush1.msra.mxu0 0.0
  %210 = vmatprep.subr.mxu0 0.0
  %211 = vmatpush1.msra.mxu0 0.0
  %212 = vmatprep.subr.mxu0 0.0
  %213 = vmatpush1.msra.mxu0 0.0
  %214 = vmatprep.subr.mxu0 0.0
  %215 = vmatpush1.msra.mxu0 0.0
  %216 = vmatprep.subr.mxu0 0.0
  %217 = vmatpush1.msra.mxu0 0.0
  %218 = vmatprep.subr.mxu0 0.0
  %219 = vmatpush1.msra.mxu0 0.0
  %220 = vmatprep.subr.mxu0 0.0
  %221 = vmatpush1.msra.mxu0 0.0
  %222 = vmatprep.subr.mxu0 0.0
  %223 = vmatpush1.msra.mxu0 0.0
  %224 = vmatprep.subr.mxu0 0.0
  %225 = vmatpush1.msra.mxu0 0.0
  %226 = vmatprep.mubr.f32.mxu0 0.0
  %227 = vmatmul.mubr.f32.gmra.mrb[0].mxu0 %v20
  %v228 = vpop.f32.mrb[0].mxu0
  %v229 = vadd.f32 0.0, %v228
  %v230 = vpop.f32.mrb[0].mxu0
  %231 = vmatprep.mubr.f32.mxu0 0.0
  %232 = vmatmul.mubr.f32.gmra.mrb[0].mxu0 %v21
  %v233 = vpop.f32.mrb[0].mxu0
  %v234 = vadd.f32 0.0, %v233
  %v235 = vpop.f32.mrb[0].mxu0
  %236 = vmatprep.mubr.f32.mxu0 0.0
  %237 = vmatmul.mubr.f32.gmra.mrb[0].mxu0 %v22
  %v238 = vpop.f32.mrb[0].mxu0
  %v239 = vadd.f32 0.0, %v238
  %v240 = vpop.f32.mrb[0].mxu0
  %241 = vmatprep.mubr.f32.mxu0 0.0
  %242 = vmatmul.mubr.f32.gmra.mrb[0].mxu0 %v23
  %v243 = vpop.f32.mrb[0].mxu0
  %v244 = vadd.f32 0.0, %v243
  %v245 = vpop.f32.mrb[0].mxu0
  %246 = vdwg.mxu0
  %247 = vmatprep.subr.mxu0 0.0
  %248 = vmatpush1.msra.mxu0 %v129
  %249 = vmatprep.subr.mxu0 0.0
  %250 = vmatpush1.msra.mxu0 %v130
  %251 = vmatprep.subr.mxu0 0.0
  %252 = vmatpush1.msra.mxu0 %v131
  %253 = vmatprep.subr.mxu0 0.0
  %254 = vmatpush1.msra.mxu0 %v132
  %255 = vmatprep.subr.mxu0 0.0
  %256 = vmatpush1.msra.mxu0 %v133
  %257 = vmatprep.subr.mxu0 0.0
  %258 = vmatpush1.msra.mxu0 %v134
  %259 = vmatprep.subr.mxu0 0.0
  %260 = vmatpush1.msra.mxu0 %v135
  %261 = vmatprep.subr.mxu0 0.0
  %262 = vmatpush1.msra.mxu0 %v136
  %263 = vmatprep.subr.mxu0 0.0
  %264 = vmatpush1.msra.mxu0 %v137
  %265 = vmatprep.subr.mxu0 0.0
  %266 = vmatpush1.msra.mxu0 %v138
  %267 = vmatprep.subr.mxu0 0.0
  %268 = vmatpush1.msra.mxu0 %v139
  %269 = vmatprep.subr.mxu0 0.0
  %270 = vmatpush1.msra.mxu0 %v140
  %271 = vmatprep.subr.mxu0 0.0
  %272 = vmatpush1.msra.mxu0 %v141
  %273 = vmatprep.subr.mxu0 0.0
  %274 = vmatpush1.msra.mxu0 %v142
  %275 = vmatprep.subr.mxu0 0.0
  %276 = vmatpush1.msra.mxu0 %v143
  %277 = vmatprep.subr.mxu0 0.0
  %278 = vmatpush1.msra.mxu0 %v144
  %279 = vmatprep.subr.mxu0 0.0
  %280 = vmatpush1.msra.mxu0 0.0
  %281 = vmatprep.subr.mxu0 0.0
  %282 = vmatpush1.msra.mxu0 0.0
  %283 = vmatprep.subr.mxu0 0.0
  %284 = vmatpush1.msra.mxu0 0.0
  %285 = vmatprep.subr.mxu0 0.0
  %286 = vmatpush1.msra.mxu0 0.0
  %287 = vmatprep.subr.mxu0 0.0
  %288 = vmatpush1.msra.mxu0 0.0
  %289 = vmatprep.subr.mxu0 0.0
  %290 = vmatpush1.msra.mxu0 0.0
  %291 = vmatprep.subr.mxu0 0.0
  %292 = vmatpush1.msra.mxu0 0.0
  %293 = vmatprep.subr.mxu0 0.0
  %294 = vmatpush1.msra.mxu0 0.0
  %295 = vmatprep.subr.mxu0 0.0
  %296 = vmatpush1.msra.mxu0 0.0
  %297 = vmatprep.subr.mxu0 0.0
  %298 = vmatpush1.msra.mxu0 0.0
  %299 = vmatprep.subr.mxu0 0.0
  %300 = vmatpush1.msra.mxu0 0.0
  %301 = vmatprep.subr.mxu0 0.0
  %302 = vmatpush1.msra.mxu0 0.0
  %303 = vmatprep.subr.mxu0 0.0
  %304 = vmatpush1.msra.mxu0 0.0
  %305 = vmatprep.subr.mxu0 0.0
  %306 = vmatpush1.msra.mxu0 0.0
  %307 = vmatprep.subr.mxu0 0.0
  %308 = vmatpush1.msra.mxu0 0.0
  %309 = vmatprep.subr.mxu0 0.0
  %310 = vmatpush1.msra.mxu0 0.0
  %311 = vmatprep.mubr.f32.mxu0 0.0
  %312 = vmatmul.mubr.f32.gmra.mrb[0].mxu0 %v104
  %v313 = vpop.f32.mrb[0].mxu0
  %v314 = vadd.f32 %v229, %v313
  %v315 = vpop.f32.mrb[0].mxu0
  %316 = vmatprep.mubr.f32.mxu0 0.0
  %317 = vmatmul.mubr.f32.gmra.mrb[0].mxu0 %v105
  %v318 = vpop.f32.mrb[0].mxu0
  %v319 = vadd.f32 %v234, %v318
  %v320 = vpop.f32.mrb[0].mxu0
  %321 = vmatprep.mubr.f32.mxu0 0.0
  %322 = vmatmul.mubr.f32.gmra.mrb[0].mxu0 %v106
  %v323 = vpop.f32.mrb[0].mxu0
  %v324 = vadd.f32 %v239, %v323
  %v325 = vpop.f32.mrb[0].mxu0
  %326 = vmatprep.mubr.f32.mxu0 0.0
  %327 = vmatmul.mubr.f32.gmra.mrb[0].mxu0 %v107
  %v328 = vpop.f32.mrb[0].mxu0
  %v329 = vadd.f32 %v244, %v328
  %v330 = vpop.f32.mrb[0].mxu0
  %331 = vdwg.mxu0
  %s332 = scalar_lea.vmem %s1, 256
  %v333 = vld [vmem:[%s332] sm:$0xff]
  %v334 = vld [vmem:[%s332 + $0x8] sm:$0xff]
  %v335 = vld [vmem:[%s332 + $0x10] sm:$0xff]
  %v336 = vld [vmem:[%s332 + $0x18] sm:$0xff]
  %v337 = vld [vmem:[%s332 + $0x20] sm:$0xff]
  %v338 = vld [vmem:[%s332 + $0x28] sm:$0xff]
  %v339 = vld [vmem:[%s332 + $0x30] sm:$0xff]
  %v340 = vld [vmem:[%s332 + $0x38] sm:$0xff]
  %v341 = vld [vmem:[%s332 + $0x40] sm:$0xff]
  %v342 = vld [vmem:[%s332 + $0x48] sm:$0xff]
  %v343 = vld [vmem:[%s332 + $0x50] sm:$0xff]
  %v344 = vld [vmem:[%s332 + $0x58] sm:$0xff]
  %v345 = vld [vmem:[%s332 + $0x60] sm:$0xff]
  %v346 = vld [vmem:[%s332 + $0x68] sm:$0xff]
  %v347 = vld [vmem:[%s332 + $0x70] sm:$0xff]
  %v348 = vld [vmem:[%s332 + $0x78] sm:$0xff]
  %349 = vmatprep.subr.mxu0 0.0
  %350 = vmatpush1.msra.mxu0 %v333
  %351 = vmatprep.subr.mxu0 0.0
  %352 = vmatpush1.msra.mxu0 %v334
  %353 = vmatprep.subr.mxu0 0.0
  %354 = vmatpush1.msra.mxu0 %v335
  %355 = vmatprep.subr.mxu0 0.0
  %356 = vmatpush1.msra.mxu0 %v336
  %357 = vmatprep.subr.mxu0 0.0
  %358 = vmatpush1.msra.mxu0 %v337
  %359 = vmatprep.subr.mxu0 0.0
  %360 = vmatpush1.msra.mxu0 %v338
  %361 = vmatprep.subr.mxu0 0.0
  %362 = vmatpush1.msra.mxu0 %v339
  %363 = vmatprep.subr.mxu0 0.0
  %364 = vmatpush1.msra.mxu0 %v340
  %365 = vmatprep.subr.mxu0 0.0
  %366 = vmatpush1.msra.mxu0 %v341
  %367 = vmatprep.subr.mxu0 0.0
  %368 = vmatpush1.msra.mxu0 %v342
  %369 = vmatprep.subr.mxu0 0.0
  %370 = vmatpush1.msra.mxu0 %v343
  %371 = vmatprep.subr.mxu0 0.0
  %372 = vmatpush1.msra.mxu0 %v344
  %373 = vmatprep.subr.mxu0 0.0
  %374 = vmatpush1.msra.mxu0 %v345
  %375 = vmatprep.subr.mxu0 0.0
  %376 = vmatpush1.msra.mxu0 %v346
  %377 = vmatprep.subr.mxu0 0.0
  %378 = vmatpush1.msra.mxu0 %v347
  %379 = vmatprep.subr.mxu0 0.0
  %380 = vmatpush1.msra.mxu0 %v348
  %381 = vmatprep.subr.mxu0 0.0
  %382 = vmatpush1.msra.mxu0 0.0
  %383 = vmatprep.subr.mxu0 0.0
  %384 = vmatpush1.msra.mxu0 0.0
  %385 = vmatprep.subr.mxu0 0.0
  %386 = vmatpush1.msra.mxu0 0.0
  %387 = vmatprep.subr.mxu0 0.0
  %388 = vmatpush1.msra.mxu0 0.0
  %389 = vmatprep.subr.mxu0 0.0
  %390 = vmatpush1.msra.mxu0 0.0
  %391 = vmatprep.subr.mxu0 0.0
  %392 = vmatpush1.msra.mxu0 0.0
  %393 = vmatprep.subr.mxu0 0.0
  %394 = vmatpush1.msra.mxu0 0.0
  %395 = vmatprep.subr.mxu0 0.0
  %396 = vmatpush1.msra.mxu0 0.0
  %397 = vmatprep.subr.mxu0 0.0
  %398 = vmatpush1.msra.mxu0 0.0
  %399 = vmatprep.subr.mxu0 0.0
  %400 = vmatpush1.msra.mxu0 0.0
  %401 = vmatprep.subr.mxu0 0.0
  %402 = vmatpush1.msra.mxu0 0.0
  %403 = vmatprep.subr.mxu0 0.0
  %404 = vmatpush1.msra.mxu0 0.0
  %405 = vmatprep.subr.mxu0 0.0
  %406 = vmatpush1.msra.mxu0 0.0
  %407 = vmatprep.subr.mxu0 0.0
  %408 = vmatpush1.msra.mxu0 0.0
  %409 = vmatprep.subr.mxu0 0.0
  %410 = vmatpush1.msra.mxu0 0.0
  %411 = vmatprep.subr.mxu0 0.0
  %412 = vmatpush1.msra.mxu0 0.0
  %413 = vmatprep.mubr.f32.mxu0 0.0
  %414 = vmatmul.mubr.f32.gmra.mrb[0].mxu0 %v125
  %v415 = vpop.f32.mrb[0].mxu0
  %v416 = vadd.f32 0.0, %v415
  %v417 = vpop.f32.mrb[0].mxu0
  %418 = vmatprep.mubr.f32.mxu0 0.0
  %419 = vmatmul.mubr.f32.gmra.mrb[0].mxu0 %v126
  %v420 = vpop.f32.mrb[0].mxu0
  %v421 = vadd.f32 0.0, %v420
  %v422 = vpop.f32.mrb[0].mxu0
  %423 = vmatprep.mubr.f32.mxu0 0.0
  %424 = vmatmul.mubr.f32.gmra.mrb[0].mxu0 %v127
  %v425 = vpop.f32.mrb[0].mxu0
  %v426 = vadd.f32 0.0, %v425
  %v427 = vpop.f32.mrb[0].mxu0
  %428 = vmatprep.mubr.f32.mxu0 0.0
  %429 = vmatmul.mubr.f32.gmra.mrb[0].mxu0 %v128
  %v430 = vpop.f32.mrb[0].mxu0
  %v431 = vadd.f32 0.0, %v430
  %v432 = vpop.f32.mrb[0].mxu0
  %433 = vdwg.mxu0
  %v434 = vadd.f32 %v314, %v416
  %v435 = vadd.f32 %v319, %v421
  %v436 = vadd.f32 %v324, %v426
  %v437 = vadd.f32 %v329, %v431
  %v439 = vlaneseq
  %v440 = vshrl.u32 %v439, 7
  %v441 = vsub.s32 0, %v440
  %v442 = vrot.slane %v85, %v441
  %v444 = vadd.f32 %v434, %v442
  %v445 = vadd.f32 %v435, %v442
  %v446 = vadd.f32 %v436, %v442
  %v447 = vadd.f32 %v437, %v442
  %v448 = vmax.f32 %v444, 0.0
  %v449 = vmax.f32 %v445, 0.0
  %v450 = vmax.f32 %v446, 0.0
  %v451 = vmax.f32 %v447, 0.0
  %v452 = vrot.slane %v448, 7
  %v453 = vrot.slane %v449, 7
  %v454 = vrot.slane %v450, 7
  %v455 = vrot.slane %v451, 7
  %v456 = vsel %vm91, %v454, %v455
  %v457 = vsel %vm91, %v453, %v454
  %v458 = vsel %vm91, %v452, %v453
  %v459 = vsel %vm91, %v455, %v452
  %v460 = vsel %vm100, 0.0, %v459
  %v461 = vsel %vm101, 0.0, %v458
  %v462 = vsel %vm102, 0.0, %v457
  %v463 = vsel %vm103, 0.0, %v456
  %v464 = vrot.slane %v448, 1
  %v465 = vrot.slane %v449, 1
  %v466 = vrot.slane %v450, 1
  %v467 = vrot.slane %v451, 1
  %v468 = vsel %vm112, %v466, %v467
  %v469 = vsel %vm112, %v465, %v466
  %v470 = vsel %vm112, %v464, %v465
  %v471 = vsel %vm112, %v467, %v464
  %v472 = vsel %vm121, 0.0, %v470
  %v473 = vsel %vm122, 0.0, %v469
  %v474 = vsel %vm123, 0.0, %v468
  %v475 = vsel %vm124, 0.0, %v471
  %v476 = vld [vmem:[%s3] sm:$0xff]
  %v477 = vld [vmem:[%s3 + $0x8] sm:$0xff]
  %v478 = vld [vmem:[%s3 + $0x10] sm:$0xff]
  %v479 = vld [vmem:[%s3 + $0x18] sm:$0xff]
  %v480 = vld [vmem:[%s3 + $0x20] sm:$0xff]
  %v481 = vld [vmem:[%s3 + $0x28] sm:$0xff]
  %v482 = vld [vmem:[%s3 + $0x30] sm:$0xff]
  %v483 = vld [vmem:[%s3 + $0x38] sm:$0xff]
  %v484 = vld [vmem:[%s3 + $0x40] sm:$0xff]
  %v485 = vld [vmem:[%s3 + $0x48] sm:$0xff]
  %v486 = vld [vmem:[%s3 + $0x50] sm:$0xff]
  %v487 = vld [vmem:[%s3 + $0x58] sm:$0xff]
  %v488 = vld [vmem:[%s3 + $0x60] sm:$0xff]
  %v489 = vld [vmem:[%s3 + $0x68] sm:$0xff]
  %v490 = vld [vmem:[%s3 + $0x70] sm:$0xff]
  %v491 = vld [vmem:[%s3 + $0x78] sm:$0xff]
  %s492 = scalar_lea.vmem %s3, 128
  %v493 = vld [vmem:[%s492] sm:$0xff]
  %v494 = vld [vmem:[%s492 + $0x8] sm:$0xff]
  %v495 = vld [vmem:[%s492 + $0x10] sm:$0xff]
  %v496 = vld [vmem:[%s492 + $0x18] sm:$0xff]
  %v497 = vld [vmem:[%s492 + $0x20] sm:$0xff]
  %v498 = vld [vmem:[%s492 + $0x28] sm:$0xff]
  %v499 = vld [vmem:[%s492 + $0x30] sm:$0xff]
  %v500 = vld [vmem:[%s492 + $0x38] sm:$0xff]
  %v501 = vld [vmem:[%s492 + $0x40] sm:$0xff]
  %v502 = vld [vmem:[%s492 + $0x48] sm:$0xff]
  %v503 = vld [vmem:[%s492 + $0x50] sm:$0xff]
  %v504 = vld [vmem:[%s492 + $0x58] sm:$0xff]
  %v505 = vld [vmem:[%s492 + $0x60] sm:$0xff]
  %v506 = vld [vmem:[%s492 + $0x68] sm:$0xff]
  %v507 = vld [vmem:[%s492 + $0x70] sm:$0xff]
  %v508 = vld [vmem:[%s492 + $0x78] sm:$0xff]
  %509 = vmatprep.subr.mxu0 0.0
  %510 = vmatpush1.msra.mxu0 %v493
  %511 = vmatprep.subr.mxu0 0.0
  %512 = vmatpush1.msra.mxu0 %v494
  %513 = vmatprep.subr.mxu0 0.0
  %514 = vmatpush1.msra.mxu0 %v495
  %515 = vmatprep.subr.mxu0 0.0
  %516 = vmatpush1.msra.mxu0 %v496
  %517 = vmatprep.subr.mxu0 0.0
  %518 = vmatpush1.msra.mxu0 %v497
  %519 = vmatprep.subr.mxu0 0.0
  %520 = vmatpush1.msra.mxu0 %v498
  %521 = vmatprep.subr.mxu0 0.0
  %522 = vmatpush1.msra.mxu0 %v499
  %523 = vmatprep.subr.mxu0 0.0
  %524 = vmatpush1.msra.mxu0 %v500
  %525 = vmatprep.subr.mxu0 0.0
  %526 = vmatpush1.msra.mxu0 %v501
  %527 = vmatprep.subr.mxu0 0.0
  %528 = vmatpush1.msra.mxu0 %v502
  %529 = vmatprep.subr.mxu0 0.0
  %530 = vmatpush1.msra.mxu0 %v503
  %531 = vmatprep.subr.mxu0 0.0
  %532 = vmatpush1.msra.mxu0 %v504
  %533 = vmatprep.subr.mxu0 0.0
  %534 = vmatpush1.msra.mxu0 %v505
  %535 = vmatprep.subr.mxu0 0.0
  %536 = vmatpush1.msra.mxu0 %v506
  %537 = vmatprep.subr.mxu0 0.0
  %538 = vmatpush1.msra.mxu0 %v507
  %539 = vmatprep.subr.mxu0 0.0
  %540 = vmatpush1.msra.mxu0 %v508
  %541 = vmatprep.subr.mxu0 0.0
  %542 = vmatpush1.msra.mxu0 0.0
  %543 = vmatprep.subr.mxu0 0.0
  %544 = vmatpush1.msra.mxu0 0.0
  %545 = vmatprep.subr.mxu0 0.0
  %546 = vmatpush1.msra.mxu0 0.0
  %547 = vmatprep.subr.mxu0 0.0
  %548 = vmatpush1.msra.mxu0 0.0
  %549 = vmatprep.subr.mxu0 0.0
  %550 = vmatpush1.msra.mxu0 0.0
  %551 = vmatprep.subr.mxu0 0.0
  %552 = vmatpush1.msra.mxu0 0.0
  %553 = vmatprep.subr.mxu0 0.0
  %554 = vmatpush1.msra.mxu0 0.0
  %555 = vmatprep.subr.mxu0 0.0
  %556 = vmatpush1.msra.mxu0 0.0
  %557 = vmatprep.subr.mxu0 0.0
  %558 = vmatpush1.msra.mxu0 0.0
  %559 = vmatprep.subr.mxu0 0.0
  %560 = vmatpush1.msra.mxu0 0.0
  %561 = vmatprep.subr.mxu0 0.0
  %562 = vmatpush1.msra.mxu0 0.0
  %563 = vmatprep.subr.mxu0 0.0
  %564 = vmatpush1.msra.mxu0 0.0
  %565 = vmatprep.subr.mxu0 0.0
  %566 = vmatpush1.msra.mxu0 0.0
  %567 = vmatprep.subr.mxu0 0.0
  %568 = vmatpush1.msra.mxu0 0.0
  %569 = vmatprep.subr.mxu0 0.0
  %570 = vmatpush1.msra.mxu0 0.0
  %571 = vmatprep.subr.mxu0 0.0
  %572 = vmatpush1.msra.mxu0 0.0
  %573 = vmatprep.mubr.f32.mxu0 0.0
  %574 = vmatmul.mubr.f32.gmra.mrb[0].mxu0 %v448
  %v575 = vpop.f32.mrb[0].mxu0
  %v576 = vadd.f32 0.0, %v575
  %v577 = vpop.f32.mrb[0].mxu0
  %578 = vmatprep.mubr.f32.mxu0 0.0
  %579 = vmatmul.mubr.f32.gmra.mrb[0].mxu0 %v449
  %v580 = vpop.f32.mrb[0].mxu0
  %v581 = vadd.f32 0.0, %v580
  %v582 = vpop.f32.mrb[0].mxu0
  %583 = vmatprep.mubr.f32.mxu0 0.0
  %584 = vmatmul.mubr.f32.gmra.mrb[0].mxu0 %v450
  %v585 = vpop.f32.mrb[0].mxu0
  %v586 = vadd.f32 0.0, %v585
  %v587 = vpop.f32.mrb[0].mxu0
  %588 = vmatprep.mubr.f32.mxu0 0.0
  %589 = vmatmul.mubr.f32.gmra.mrb[0].mxu0 %v451
  %v590 = vpop.f32.mrb[0].mxu0
  %v591 = vadd.f32 0.0, %v590
  %v592 = vpop.f32.mrb[0].mxu0
  %593 = vdwg.mxu0
  %594 = vmatprep.subr.mxu0 0.0
  %595 = vmatpush1.msra.mxu0 %v476
  %596 = vmatprep.subr.mxu0 0.0
  %597 = vmatpush1.msra.mxu0 %v477
  %598 = vmatprep.subr.mxu0 0.0
  %599 = vmatpush1.msra.mxu0 %v478
  %600 = vmatprep.subr.mxu0 0.0
  %601 = vmatpush1.msra.mxu0 %v479
  %602 = vmatprep.subr.mxu0 0.0
  %603 = vmatpush1.msra.mxu0 %v480
  %604 = vmatprep.subr.mxu0 0.0
  %605 = vmatpush1.msra.mxu0 %v481
  %606 = vmatprep.subr.mxu0 0.0
  %607 = vmatpush1.msra.mxu0 %v482
  %608 = vmatprep.subr.mxu0 0.0
  %609 = vmatpush1.msra.mxu0 %v483
  %610 = vmatprep.subr.mxu0 0.0
  %611 = vmatpush1.msra.mxu0 %v484
  %612 = vmatprep.subr.mxu0 0.0
  %613 = vmatpush1.msra.mxu0 %v485
  %614 = vmatprep.subr.mxu0 0.0
  %615 = vmatpush1.msra.mxu0 %v486
  %616 = vmatprep.subr.mxu0 0.0
  %617 = vmatpush1.msra.mxu0 %v487
  %618 = vmatprep.subr.mxu0 0.0
  %619 = vmatpush1.msra.mxu0 %v488
  %620 = vmatprep.subr.mxu0 0.0
  %621 = vmatpush1.msra.mxu0 %v489
  %622 = vmatprep.subr.mxu0 0.0
  %623 = vmatpush1.msra.mxu0 %v490
  %624 = vmatprep.subr.mxu0 0.0
  %625 = vmatpush1.msra.mxu0 %v491
  %626 = vmatprep.subr.mxu0 0.0
  %627 = vmatpush1.msra.mxu0 0.0
  %628 = vmatprep.subr.mxu0 0.0
  %629 = vmatpush1.msra.mxu0 0.0
  %630 = vmatprep.subr.mxu0 0.0
  %631 = vmatpush1.msra.mxu0 0.0
  %632 = vmatprep.subr.mxu0 0.0
  %633 = vmatpush1.msra.mxu0 0.0
  %634 = vmatprep.subr.mxu0 0.0
  %635 = vmatpush1.msra.mxu0 0.0
  %636 = vmatprep.subr.mxu0 0.0
  %637 = vmatpush1.msra.mxu0 0.0
  %638 = vmatprep.subr.mxu0 0.0
  %639 = vmatpush1.msra.mxu0 0.0
  %640 = vmatprep.subr.mxu0 0.0
  %641 = vmatpush1.msra.mxu0 0.0
  %642 = vmatprep.subr.mxu0 0.0
  %643 = vmatpush1.msra.mxu0 0.0
  %644 = vmatprep.subr.mxu0 0.0
  %645 = vmatpush1.msra.mxu0 0.0
  %646 = vmatprep.subr.mxu0 0.0
  %647 = vmatpush1.msra.mxu0 0.0
  %648 = vmatprep.subr.mxu0 0.0
  %649 = vmatpush1.msra.mxu0 0.0
  %650 = vmatprep.subr.mxu0 0.0
  %651 = vmatpush1.msra.mxu0 0.0
  %652 = vmatprep.subr.mxu0 0.0
  %653 = vmatpush1.msra.mxu0 0.0
  %654 = vmatprep.subr.mxu0 0.0
  %655 = vmatpush1.msra.mxu0 0.0
  %656 = vmatprep.subr.mxu0 0.0
  %657 = vmatpush1.msra.mxu0 0.0
  %658 = vmatprep.mubr.f32.mxu0 0.0
  %659 = vmatmul.mubr.f32.gmra.mrb[0].mxu0 %v460
  %v660 = vpop.f32.mrb[0].mxu0
  %v661 = vadd.f32 %v576, %v660
  %v662 = vpop.f32.mrb[0].mxu0
  %663 = vmatprep.mubr.f32.mxu0 0.0
  %664 = vmatmul.mubr.f32.gmra.mrb[0].mxu0 %v461
  %v665 = vpop.f32.mrb[0].mxu0
  %v666 = vadd.f32 %v581, %v665
  %v667 = vpop.f32.mrb[0].mxu0
  %668 = vmatprep.mubr.f32.mxu0 0.0
  %669 = vmatmul.mubr.f32.gmra.mrb[0].mxu0 %v462
  %v670 = vpop.f32.mrb[0].mxu0
  %v671 = vadd.f32 %v586, %v670
  %v672 = vpop.f32.mrb[0].mxu0
  %673 = vmatprep.mubr.f32.mxu0 0.0
  %674 = vmatmul.mubr.f32.gmra.mrb[0].mxu0 %v463
  %v675 = vpop.f32.mrb[0].mxu0
  %v676 = vadd.f32 %v591, %v675
  %v677 = vpop.f32.mrb[0].mxu0
  %678 = vdwg.mxu0
  %s679 = scalar_lea.vmem %s3, 256
  %v680 = vld [vmem:[%s679] sm:$0xff]
  %v681 = vld [vmem:[%s679 + $0x8] sm:$0xff]
  %v682 = vld [vmem:[%s679 + $0x10] sm:$0xff]
  %v683 = vld [vmem:[%s679 + $0x18] sm:$0xff]
  %v684 = vld [vmem:[%s679 + $0x20] sm:$0xff]
  %v685 = vld [vmem:[%s679 + $0x28] sm:$0xff]
  %v686 = vld [vmem:[%s679 + $0x30] sm:$0xff]
  %v687 = vld [vmem:[%s679 + $0x38] sm:$0xff]
  %v688 = vld [vmem:[%s679 + $0x40] sm:$0xff]
  %v689 = vld [vmem:[%s679 + $0x48] sm:$0xff]
  %v690 = vld [vmem:[%s679 + $0x50] sm:$0xff]
  %v691 = vld [vmem:[%s679 + $0x58] sm:$0xff]
  %v692 = vld [vmem:[%s679 + $0x60] sm:$0xff]
  %v693 = vld [vmem:[%s679 + $0x68] sm:$0xff]
  %v694 = vld [vmem:[%s679 + $0x70] sm:$0xff]
  %v695 = vld [vmem:[%s679 + $0x78] sm:$0xff]
  %696 = vmatprep.subr.mxu0 0.0
  %697 = vmatpush1.msra.mxu0 %v680
  %698 = vmatprep.subr.mxu0 0.0
  %699 = vmatpush1.msra.mxu0 %v681
  %700 = vmatprep.subr.mxu0 0.0
  %701 = vmatpush1.msra.mxu0 %v682
  %702 = vmatprep.subr.mxu0 0.0
  %703 = vmatpush1.msra.mxu0 %v683
  %704 = vmatprep.subr.mxu0 0.0
  %705 = vmatpush1.msra.mxu0 %v684
  %706 = vmatprep.subr.mxu0 0.0
  %707 = vmatpush1.msra.mxu0 %v685
  %708 = vmatprep.subr.mxu0 0.0
  %709 = vmatpush1.msra.mxu0 %v686
  %710 = vmatprep.subr.mxu0 0.0
  %711 = vmatpush1.msra.mxu0 %v687
  %712 = vmatprep.subr.mxu0 0.0
  %713 = vmatpush1.msra.mxu0 %v688
  %714 = vmatprep.subr.mxu0 0.0
  %715 = vmatpush1.msra.mxu0 %v689
  %716 = vmatprep.subr.mxu0 0.0
  %717 = vmatpush1.msra.mxu0 %v690
  %718 = vmatprep.subr.mxu0 0.0
  %719 = vmatpush1.msra.mxu0 %v691
  %720 = vmatprep.subr.mxu0 0.0
  %721 = vmatpush1.msra.mxu0 %v692
  %722 = vmatprep.subr.mxu0 0.0
  %723 = vmatpush1.msra.mxu0 %v693
  %724 = vmatprep.subr.mxu0 0.0
  %725 = vmatpush1.msra.mxu0 %v694
  %726 = vmatprep.subr.mxu0 0.0
  %727 = vmatpush1.msra.mxu0 %v695
  %728 = vmatprep.subr.mxu0 0.0
  %729 = vmatpush1.msra.mxu0 0.0
  %730 = vmatprep.subr.mxu0 0.0
  %731 = vmatpush1.msra.mxu0 0.0
  %732 = vmatprep.subr.mxu0 0.0
  %733 = vmatpush1.msra.mxu0 0.0
  %734 = vmatprep.subr.mxu0 0.0
  %735 = vmatpush1.msra.mxu0 0.0
  %736 = vmatprep.subr.mxu0 0.0
  %737 = vmatpush1.msra.mxu0 0.0
  %738 = vmatprep.subr.mxu0 0.0
  %739 = vmatpush1.msra.mxu0 0.0
  %740 = vmatprep.subr.mxu0 0.0
  %741 = vmatpush1.msra.mxu0 0.0
  %742 = vmatprep.subr.mxu0 0.0
  %743 = vmatpush1.msra.mxu0 0.0
  %744 = vmatprep.subr.mxu0 0.0
  %745 = vmatpush1.msra.mxu0 0.0
  %746 = vmatprep.subr.mxu0 0.0
  %747 = vmatpush1.msra.mxu0 0.0
  %748 = vmatprep.subr.mxu0 0.0
  %749 = vmatpush1.msra.mxu0 0.0
  %750 = vmatprep.subr.mxu0 0.0
  %751 = vmatpush1.msra.mxu0 0.0
  %752 = vmatprep.subr.mxu0 0.0
  %753 = vmatpush1.msra.mxu0 0.0
  %754 = vmatprep.subr.mxu0 0.0
  %755 = vmatpush1.msra.mxu0 0.0
  %756 = vmatprep.subr.mxu0 0.0
  %757 = vmatpush1.msra.mxu0 0.0
  %758 = vmatprep.subr.mxu0 0.0
  %759 = vmatpush1.msra.mxu0 0.0
  %760 = vmatprep.mubr.f32.mxu0 0.0
  %761 = vmatmul.mubr.f32.gmra.mrb[0].mxu0 %v472
  %v762 = vpop.f32.mrb[0].mxu0
  %v763 = vadd.f32 0.0, %v762
  %v764 = vpop.f32.mrb[0].mxu0
  %765 = vmatprep.mubr.f32.mxu0 0.0
  %766 = vmatmul.mubr.f32.gmra.mrb[0].mxu0 %v473
  %v767 = vpop.f32.mrb[0].mxu0
  %v768 = vadd.f32 0.0, %v767
  %v769 = vpop.f32.mrb[0].mxu0
  %770 = vmatprep.mubr.f32.mxu0 0.0
  %771 = vmatmul.mubr.f32.gmra.mrb[0].mxu0 %v474
  %v772 = vpop.f32.mrb[0].mxu0
  %v773 = vadd.f32 0.0, %v772
  %v774 = vpop.f32.mrb[0].mxu0
  %775 = vmatprep.mubr.f32.mxu0 0.0
  %776 = vmatmul.mubr.f32.gmra.mrb[0].mxu0 %v475
  %v777 = vpop.f32.mrb[0].mxu0
  %v778 = vadd.f32 0.0, %v777
  %v779 = vpop.f32.mrb[0].mxu0
  %780 = vdwg.mxu0
  %v781 = vadd.f32 %v661, %v763
  %v782 = vadd.f32 %v666, %v768
  %v783 = vadd.f32 %v671, %v773
  %v784 = vadd.f32 %v676, %v778
  %v786 = vlaneseq
  %v787 = vshrl.u32 %v786, 7
  %v788 = vsub.s32 0, %v787
  %v789 = vrot.slane %v86, %v788
  %v791 = vadd.f32 %v781, %v789
  %v792 = vadd.f32 %v782, %v789
  %v793 = vadd.f32 %v783, %v789
  %v794 = vadd.f32 %v784, %v789
  %v795 = vadd.f32 %v791, %v20
  %v796 = vadd.f32 %v792, %v21
  %v797 = vadd.f32 %v793, %v22
  %v798 = vadd.f32 %v794, %v23
  %v799 = vmax.f32 %v795, 0.0
  %v800 = vmax.f32 %v796, 0.0
  %v801 = vmax.f32 %v797, 0.0
  %v802 = vmax.f32 %v798, 0.0
  %803 = vst [vmem:[%s5] sm:$0xff] %v799
  %804 = vst [vmem:[%s5 + $0x8] sm:$0xff] %v800
  %805 = vst [vmem:[%s5 + $0x10] sm:$0xff] %v801
  %806 = vst [vmem:[%s5 + $0x18] sm:$0xff] %v802
  // Predicated region
  $region22: #{basic_block_forward.1} parent=0 // pred_check
    _
  $region23: #{basic_block_forward.1} parent=0 // pred_check_branch
    %808 = sbr.rel (0) target = $region25
  $region24: #{basic_block_forward.1} parent=0 // pred_region
    _
  $region25: #{basic_block_forward.1} parent=0 // pred_fallthru
    _
  // Predicated region
  $region26: #{basic_block_forward.1} parent=0 // pred_check
    _
  $region27: #{basic_block_forward.1} parent=0 // pred_check_branch
    %810 = sbr.rel (0) target = $region29
  $region28: #{basic_block_forward.1} parent=0 // pred_region
    _
  $region29: #{basic_block_forward.1} parent=0 // pred_fallthru
    _

</llo_original>
